<compile_context>
chip_gen: v6e
topology: v6e:2x2x1
jax: 0.10.0
libtpu: 0.0.40
codegen_flags: <defaults>
</compile_context>

<pallas_src>
import functools

import jax
import jax.numpy as jnp
from jax.experimental import pallas as pl
from jax.experimental.pallas import tpu as pltpu

D_IN = 784
D_OUT = 10
D_OUT_PAD = 128  # lane-dense output width (one 128-lane vreg)


def linear_kernel(x_ref, w_ref, b_ref, o_ref):
    # x_ref: (TB, 784) bf16   w_ref: (784, 128) bf16
    # b_ref: (1, 128)  f32    o_ref: (TB, 128)  f32
    acc = jnp.dot(x_ref[...], w_ref[...], preferred_element_type=jnp.float32)
    o_ref[...] = (acc + b_ref[...]).astype(o_ref.dtype)
    # TODO(synk): when used in training, fuse log_softmax / NLL loss here so x
    # is read from HBM exactly once (this standalone tiny GEMM is
    # bandwidth/overhead-dominated, not MXU-bound).


@functools.partial(jax.jit, static_argnames=("tb",))
def mnist_logistic_forward(x, w, b, *, tb=512):
    """Forward pass of nn.Linear(784, 10).

    x: (B, 784) f32, w: (10, 784) f32 (PyTorch layout), b: (10,) f32
    returns: (B, 10) f32
    """
    B, d_in = x.shape
    d_out = w.shape[0]
    assert d_in == D_IN and d_out == D_OUT

    # ---- Parameter prep (outside the kernel, done once under jit) ----------
    # Transpose to (784, 10), pad output dim to a lane-dense 128, cast to bf16.
    w_pad = jnp.pad(w.T.astype(jnp.bfloat16), ((0, 0), (0, D_OUT_PAD - d_out)))
    b_pad = jnp.pad(b.astype(jnp.float32), (0, D_OUT_PAD - d_out)).reshape(1, D_OUT_PAD)

    # ---- Batch tiling -------------------------------------------------------
    # TB=512 bf16 x tile -> ~0.8 MiB per buffer: comfortably under the scoped
    # VMEM limit on v5e/v6e/v7x even with double-buffering.
    tb_eff = min(tb, max(B, 8))
    tb_eff = ((tb_eff + 7) // 8) * 8           # sublane-aligned (multiple of 8)
    n_blocks = pl.cdiv(B, tb_eff)
    B_pad = n_blocks * tb_eff

    x_bf = x.astype(jnp.bfloat16)
    if B_pad != B:
        x_bf = jnp.pad(x_bf, ((0, B_pad - B), (0, 0)))

    cost = pl.CostEstimate(
        flops=2 * B_pad * d_in * D_OUT_PAD,
        transcendentals=0,
        bytes_accessed=(2 * B_pad * d_in            # x (bf16)
                        + 2 * d_in * D_OUT_PAD      # w (bf16)
                        + 4 * D_OUT_PAD             # bias (f32)
                        + 4 * B_pad * D_OUT_PAD),   # out (f32)
    )

    out_pad = pl.pallas_call(
        linear_kernel,
        out_shape=jax.ShapeDtypeStruct((B_pad, D_OUT_PAD), jnp.float32),
        grid_spec=pl.GridSpec(
            grid=(n_blocks,),
            in_specs=[
                pl.BlockSpec((tb_eff, d_in), lambda i: (i, 0)),       # x tile
                pl.BlockSpec((d_in, D_OUT_PAD), lambda i: (0, 0)),    # weight (resident)
                pl.BlockSpec((1, D_OUT_PAD), lambda i: (0, 0)),       # bias (resident)
            ],
            out_specs=pl.BlockSpec((tb_eff, D_OUT_PAD), lambda i: (i, 0)),
        ),
        compiler_params=pltpu.CompilerParams(
            dimension_semantics=("parallel",),
        ),
        cost_estimate=cost,
    )(x_bf, w_pad, b_pad)

    # Strip batch padding and the lane padding of the output dim.
    return out_pad[:B, :d_out]


if __name__ == "__main__":
    bs = 64             # batch size from the tutorial
    d_in, d_out = D_IN, D_OUT

    key = jax.random.PRNGKey(0)
    kx, kw, kb = jax.random.split(key, 3)

    # Deterministic parameter init (shapes from nn.Linear(784, 10)).
    bound = 1.0 / (d_in ** 0.5)
    w = jax.random.uniform(kw, (d_out, d_in), jnp.float32, -bound, bound)  # PyTorch layout
    b = jax.random.uniform(kb, (d_out,), jnp.float32, -bound, bound)

    x = jax.random.uniform(kx, (bs, d_in), jnp.float32)  # MNIST pixels in [0, 1)

    out = mnist_logistic_forward(x, w, b)
    out = jax.block_until_ready(out)

    # Reference with the same bf16 input rounding (f32 accumulation).
    x_bf = x.astype(jnp.bfloat16).astype(jnp.float32)
    w_bf = w.astype(jnp.bfloat16).astype(jnp.float32)
    ref = x_bf @ w_bf.T + b

    assert out.shape == (bs, d_out)
    assert jnp.allclose(out, ref, atol=1e-3, rtol=1e-3)
    # Sanity against the full-precision linear layer (bf16 input rounding only).
    ref_f32 = x @ w.T + b
    assert jnp.allclose(out, ref_f32, atol=5e-2, rtol=5e-2)

    print("KERNEL_OK")
</pallas_src>

<mosaic_0001>
module attributes {stable_mosaic.version = 11 : i64} {
  func.func @linear_kernel(%arg0: i32, %arg1: memref<64x784xbf16, #tpu.memory_space<vmem>>, %arg2: memref<784x128xbf16, #tpu.memory_space<vmem>>, %arg3: memref<1x128xf32, #tpu.memory_space<vmem>>, %arg4: memref<64x128xf32, #tpu.memory_space<vmem>>) attributes {dimension_semantics = [#tpu.dimension_semantics<parallel>], iteration_bounds = array<i64: 1>, scalar_prefetch = 0 : i64, scratch_operands = 0 : i64, tpu.core_type = #tpu.core_type<tc>, window_params = [{transform_indices = @transform_0, window_bounds = array<i64: 64, 784>}, {pipeline_mode = #tpu.pipeline_mode<synchronous>, transform_indices = @transform_1, window_bounds = array<i64: 784, 128>}, {pipeline_mode = #tpu.pipeline_mode<synchronous>, transform_indices = @transform_2, window_bounds = array<i64: 1, 128>}, {transform_indices = @transform_3, window_bounds = array<i64: 64, 128>}]} {
    %c0 = arith.constant 0 : index
    %c0_0 = arith.constant 0 : index
    %0 = vector.load %arg1[%c0, %c0_0] : memref<64x784xbf16, #tpu.memory_space<vmem>>, vector<64x784xbf16>
    %c0_1 = arith.constant 0 : index
    %c0_2 = arith.constant 0 : index
    %1 = vector.load %arg2[%c0_1, %c0_2] : memref<784x128xbf16, #tpu.memory_space<vmem>>, vector<784x128xbf16>
    %cst = arith.constant dense<0.000000e+00> : vector<64x128xf32>
    %2 = tpu.matmul %0, %1, %cst {dimension_numbers = #tpu.dot_dimension_numbers<[1], [0], [0], [1], [0, 0, 1, 1], [], []>} : vector<64x784xbf16>, vector<784x128xbf16>, vector<64x128xf32> -> vector<64x128xf32>
    %c0_3 = arith.constant 0 : index
    %c0_4 = arith.constant 0 : index
    %3 = vector.load %arg3[%c0_3, %c0_4] : memref<1x128xf32, #tpu.memory_space<vmem>>, vector<1x128xf32>
    %4 = vector.broadcast %3 : vector<1x128xf32> to vector<64x128xf32>
    %5 = arith.addf %2, %4 : vector<64x128xf32>
    %c0_5 = arith.constant 0 : index
    %c0_6 = arith.constant 0 : index
    %6 = vector.load %arg4[%c0_5, %c0_6] : memref<64x128xf32, #tpu.memory_space<vmem>>, vector<64x128xf32>
    tpu.vector_store %arg4[%c0_5, %c0_6], %5 {strides = array<i32>} : memref<64x128xf32, #tpu.memory_space<vmem>>, vector<64x128xf32>,
    return
  }
  func.func @transform_0(%arg0: i32) -> (i32, i32) {
    %c0_i32 = arith.constant 0 : i32
    %c0_i32_0 = arith.constant 0 : i32
    return %arg0, %c0_i32 : i32, i32
  }
  func.func @transform_1(%arg0: i32) -> (i32, i32) {
    %c0_i32 = arith.constant 0 : i32
    %c0_i32_0 = arith.constant 0 : i32
    %c0_i32_1 = arith.constant 0 : i32
    return %c0_i32, %c0_i32_0 : i32, i32
  }
  func.func @transform_2(%arg0: i32) -> (i32, i32) {
    %c0_i32 = arith.constant 0 : i32
    %c0_i32_0 = arith.constant 0 : i32
    %c0_i32_1 = arith.constant 0 : i32
    return %c0_i32, %c0_i32_0 : i32, i32
  }
  func.func @transform_3(%arg0: i32) -> (i32, i32) {
    %c0_i32 = arith.constant 0 : i32
    %c0_i32_0 = arith.constant 0 : i32
    return %arg0, %c0_i32 : i32, i32
  }
}

</mosaic_0001>

<llo_original>
// kernel: mnist_logistic_forward.1
$region0: #{mnist_logistic_forward.1}
  #allocation0 [shape = 'u32[]', space=smem, size = 0x4, offset = 0x4, fixed_abs, tag = 'smem constant byte address 0x4 - core index']
  #allocation1 [shape = 'u32[144,128]{1,0:T(1,128)}', space=vmem, size = 0x12000, scoped, tag = 'internal scratch']
  %s0 = inlined_call_operand.vmem [shape: bf16[64,784], index: 0, kind: input, shape index: {}]
  %s1 = inlined_call_operand.vmem [shape: bf16[784,128], index: 1, kind: input, shape index: {}]
  %s2 = inlined_call_operand.vmem [shape: f32[1,128], index: 2, kind: input, shape index: {}]
  %s3 = inlined_call_operand.vmem [shape: f32[64,128], index: 3, kind: output, shape index: {}]
  %s4 = sld [smem:[#allocation0]]
  $region22: #{mnist_logistic_forward.1} parent=0
    _
  %s6 = ssub.s32 1, %s4
  %s7 = scalar_select 0, %s6, %s4
  // Predicated region
  $region2: #{mnist_logistic_forward.1} parent=0 // pred_check
    _
  $region3: #{mnist_logistic_forward.1} parent=0 // pred_check_branch
    %9 = sbr.rel (0) target = $region5
  $region4: #{mnist_logistic_forward.1} parent=0 // pred_region
    _
  $region5: #{mnist_logistic_forward.1} parent=0 // pred_fallthru
    _
  // Predicated region
  $region6: #{mnist_logistic_forward.1} parent=0 // pred_check
    _
  $region7: #{mnist_logistic_forward.1} parent=0 // pred_check_branch
    %11 = sbr.rel (0) target = $region9
  $region8: #{mnist_logistic_forward.1} parent=0 // pred_region
    _
  $region9: #{mnist_logistic_forward.1} parent=0 // pred_fallthru
    _
  // Predicated region
  $region10: #{mnist_logistic_forward.1} parent=0 // pred_check
    _
  $region11: #{mnist_logistic_forward.1} parent=0 // pred_check_branch
    %13 = sbr.rel (0) target = $region13
  $region12: #{mnist_logistic_forward.1} parent=0 // pred_region
    _
  $region13: #{mnist_logistic_forward.1} parent=0 // pred_fallthru
    _
  %v15 = vld [vmem:[%s0] sm:$0xff]
  %v16 = vld [vmem:[%s0 + $0x8] sm:$0xff]
  %v17 = vld [vmem:[%s0 + $0x10] sm:$0xff]
  %v18 = vld [vmem:[%s0 + $0x18] sm:$0xf]
  %v19 = vld [vmem:[%s0 + $0x1c] sm:$0xff]
  %v20 = vld [vmem:[%s0 + $0x24] sm:$0xff]
  %v21 = vld [vmem:[%s0 + $0x2c] sm:$0xff]
  %v22 = vld [vmem:[%s0 + $0x34] sm:$0xf]
  %v23 = vld [vmem:[%s0 + $0x38] sm:$0xff]
  %v24 = vld [vmem:[%s0 + $0x40] sm:$0xff]
  %v25 = vld [vmem:[%s0 + $0x48] sm:$0xff]
  %v26 = vld [vmem:[%s0 + $0x50] sm:$0xf]
  %v27 = vld [vmem:[%s0 + $0x54] sm:$0xff]
  %v28 = vld [vmem:[%s0 + $0x5c] sm:$0xff]
  %v29 = vld [vmem:[%s0 + $0x64] sm:$0xff]
  %v30 = vld [vmem:[%s0 + $0x6c] sm:$0xf]
  %v31 = vld [vmem:[%s0 + $0x70] sm:$0xff]
  %v32 = vld [vmem:[%s0 + $0x78] sm:$0xff]
  %v33 = vld [vmem:[%s0 + $0x80] sm:$0xff]
  %v34 = vld [vmem:[%s0 + $0x88] sm:$0xf]
  %v35 = vld [vmem:[%s0 + $0x8c] sm:$0xff]
  %v36 = vld [vmem:[%s0 + $0x94] sm:$0xff]
  %v37 = vld [vmem:[%s0 + $0x9c] sm:$0xff]
  %v38 = vld [vmem:[%s0 + $0xa4] sm:$0xf]
  %v39 = vld [vmem:[%s0 + $0xa8] sm:$0xff]
  %v40 = vld [vmem:[%s0 + $0xb0] sm:$0xff]
  %v41 = vld [vmem:[%s0 + $0xb8] sm:$0xff]
  %v42 = vld [vmem:[%s0 + $0xc0] sm:$0xf]
  %v43 = vld [vmem:[%s0 + $0xc4] sm:$0xff]
  %v44 = vld [vmem:[%s0 + $0xcc] sm:$0xff]
  %v45 = vld [vmem:[%s0 + $0xd4] sm:$0xff]
  %v46 = vld [vmem:[%s0 + $0xdc] sm:$0xf]
  %v47 = vld [vmem:[%s1] sm:$0xf]
  %v48 = vld [vmem:[%s1 + $0x4] sm:$0xf]
  %v49 = vld [vmem:[%s1 + $0x8] sm:$0xf]
  %v50 = vld [vmem:[%s1 + $0xc] sm:$0xf]
  %v51 = vld [vmem:[%s1 + $0x10] sm:$0xf]
  %v52 = vld [vmem:[%s1 + $0x14] sm:$0xf]
  %v53 = vld [vmem:[%s1 + $0x18] sm:$0xf]
  %v54 = vld [vmem:[%s1 + $0x1c] sm:$0xf]
  %v55 = vld [vmem:[%s1 + $0x20] sm:$0xf]
  %v56 = vld [vmem:[%s1 + $0x24] sm:$0xf]
  %v57 = vld [vmem:[%s1 + $0x28] sm:$0xf]
  %v58 = vld [vmem:[%s1 + $0x2c] sm:$0xf]
  %v59 = vld [vmem:[%s1 + $0x30] sm:$0xf]
  %v60 = vld [vmem:[%s1 + $0x34] sm:$0xf]
  %v61 = vld [vmem:[%s1 + $0x38] sm:$0xf]
  %v62 = vld [vmem:[%s1 + $0x3c] sm:$0xf]
  %v63 = vld [vmem:[%s1 + $0x40] sm:$0xf]
  %v64 = vld [vmem:[%s1 + $0x44] sm:$0xf]
  %v65 = vld [vmem:[%s1 + $0x48] sm:$0xf]
  %v66 = vld [vmem:[%s1 + $0x4c] sm:$0xf]
  %v67 = vld [vmem:[%s1 + $0x50] sm:$0xf]
  %v68 = vld [vmem:[%s1 + $0x54] sm:$0xf]
  %v69 = vld [vmem:[%s1 + $0x58] sm:$0xf]
  %v70 = vld [vmem:[%s1 + $0x5c] sm:$0xf]
  %v71 = vld [vmem:[%s1 + $0x60] sm:$0xf]
  %v72 = vld [vmem:[%s1 + $0x64] sm:$0xf]
  %v73 = vld [vmem:[%s1 + $0x68] sm:$0xf]
  %v74 = vld [vmem:[%s1 + $0x6c] sm:$0xf]
  %v75 = vld [vmem:[%s1 + $0x70] sm:$0xf]
  %v76 = vld [vmem:[%s1 + $0x74] sm:$0xf]
  %v77 = vld [vmem:[%s1 + $0x78] sm:$0xf]
  %v78 = vld [vmem:[%s1 + $0x7c] sm:$0xf]
  %v79 = vld [vmem:[%s1 + $0x80] sm:$0xf]
  %v80 = vld [vmem:[%s1 + $0x84] sm:$0xf]
  %v81 = vld [vmem:[%s1 + $0x88] sm:$0xf]
  %v82 = vld [vmem:[%s1 + $0x8c] sm:$0xf]
  %v83 = vld [vmem:[%s1 + $0x90] sm:$0xf]
  %v84 = vld [vmem:[%s1 + $0x94] sm:$0xf]
  %v85 = vld [vmem:[%s1 + $0x98] sm:$0xf]
  %v86 = vld [vmem:[%s1 + $0x9c] sm:$0xf]
  %v87 = vld [vmem:[%s1 + $0xa0] sm:$0xf]
  %v88 = vld [vmem:[%s1 + $0xa4] sm:$0xf]
  %v89 = vld [vmem:[%s1 + $0xa8] sm:$0xf]
  %v90 = vld [vmem:[%s1 + $0xac] sm:$0xf]
  %v91 = vld [vmem:[%s1 + $0xb0] sm:$0xf]
  %v92 = vld [vmem:[%s1 + $0xb4] sm:$0xf]
  %v93 = vld [vmem:[%s1 + $0xb8] sm:$0xf]
  %v94 = vld [vmem:[%s1 + $0xbc] sm:$0xf]
  %v95 = vld [vmem:[%s1 + $0xc0] sm:$0xf]
  %v96 = vld [vmem:[%s1 + $0xc4] sm:$0xf]
  %v97 = vld [vmem:[%s1 + $0xc8] sm:$0xf]
  %v98 = vld [vmem:[%s1 + $0xcc] sm:$0xf]
  %v99 = vld [vmem:[%s1 + $0xd0] sm:$0xf]
  %v100 = vld [vmem:[%s1 + $0xd4] sm:$0xf]
  %v101 = vld [vmem:[%s1 + $0xd8] sm:$0xf]
  %v102 = vld [vmem:[%s1 + $0xdc] sm:$0xf]
  %v103 = vld [vmem:[%s1 + $0xe0] sm:$0xf]
  %v104 = vld [vmem:[%s1 + $0xe4] sm:$0xf]
  %v105 = vld [vmem:[%s1 + $0xe8] sm:$0xf]
  %v106 = vld [vmem:[%s1 + $0xec] sm:$0xf]
  %v107 = vld [vmem:[%s1 + $0xf0] sm:$0xf]
  %v108 = vld [vmem:[%s1 + $0xf4] sm:$0xf]
  %v109 = vld [vmem:[%s1 + $0xf8] sm:$0xf]
  %v110 = vld [vmem:[%s1 + $0xfc] sm:$0xf]
  %v111 = vld [vmem:[%s1 + $0x100] sm:$0xf]
  %v112 = vld [vmem:[%s1 + $0x104] sm:$0xf]
  %v113 = vld [vmem:[%s1 + $0x108] sm:$0xf]
  %v114 = vld [vmem:[%s1 + $0x10c] sm:$0xf]
  %v115 = vld [vmem:[%s1 + $0x110] sm:$0xf]
  %v116 = vld [vmem:[%s1 + $0x114] sm:$0xf]
  %v117 = vld [vmem:[%s1 + $0x118] sm:$0xf]
  %v118 = vld [vmem:[%s1 + $0x11c] sm:$0xf]
  %v119 = vld [vmem:[%s1 + $0x120] sm:$0xf]
  %v120 = vld [vmem:[%s1 + $0x124] sm:$0xf]
  %v121 = vld [vmem:[%s1 + $0x128] sm:$0xf]
  %v122 = vld [vmem:[%s1 + $0x12c] sm:$0xf]
  %v123 = vld [vmem:[%s1 + $0x130] sm:$0xf]
  %v124 = vld [vmem:[%s1 + $0x134] sm:$0xf]
  %v125 = vld [vmem:[%s1 + $0x138] sm:$0xf]
  %v126 = vld [vmem:[%s1 + $0x13c] sm:$0xf]
  %v127 = vld [vmem:[%s1 + $0x140] sm:$0xf]
  %v128 = vld [vmem:[%s1 + $0x144] sm:$0xf]
  %v129 = vld [vmem:[%s1 + $0x148] sm:$0xf]
  %v130 = vld [vmem:[%s1 + $0x14c] sm:$0xf]
  %v131 = vld [vmem:[%s1 + $0x150] sm:$0xf]
  %v132 = vld [vmem:[%s1 + $0x154] sm:$0xf]
  %v133 = vld [vmem:[%s1 + $0x158] sm:$0xf]
  %v134 = vld [vmem:[%s1 + $0x15c] sm:$0xf]
  %v135 = vld [vmem:[%s1 + $0x160] sm:$0xf]
  %v136 = vld [vmem:[%s1 + $0x164] sm:$0xf]
  %v137 = vld [vmem:[%s1 + $0x168] sm:$0xf]
  %v138 = vld [vmem:[%s1 + $0x16c] sm:$0xf]
  %v139 = vld [vmem:[%s1 + $0x170] sm:$0xf]
  %v140 = vld [vmem:[%s1 + $0x174] sm:$0xf]
  %v141 = vld [vmem:[%s1 + $0x178] sm:$0xf]
  %v142 = vld [vmem:[%s1 + $0x17c] sm:$0xf]
  %v143 = vld [vmem:[%s1 + $0x180] sm:$0xf]
  %v144 = vld [vmem:[%s1 + $0x184] sm:$0xf]
  %v145 = vld [vmem:[%s2] sm:$0x1]
  %v147 = vlaneseq
  %v148 = vshrl.u32 %v147, 7
  %v149 = vsub.s32 0, %v148
  %v150 = vrot.slane %v145, %v149
  %v184 = vunpack.c.l.b16 %v15
  %v185 = vunpack.c.h.b16 %v15
  %v186 = vunpack.c.l.b16 %v16
  %v187 = vunpack.c.h.b16 %v16
  %v188 = vunpack.c.l.b16 %v17
  %v189 = vunpack.c.h.b16 %v17
  %v190 = vunpack.c.l.b16 %v18
  %v191 = vunpack.c.l.b16 %v19
  %v192 = vunpack.c.h.b16 %v19
  %v193 = vunpack.c.l.b16 %v20
  %v194 = vunpack.c.h.b16 %v20
  %v195 = vunpack.c.l.b16 %v21
  %v196 = vunpack.c.h.b16 %v21
  %v197 = vunpack.c.l.b16 %v22
  %v198 = vunpack.c.l.b16 %v23
  %v199 = vunpack.c.h.b16 %v23
  %v200 = vunpack.c.l.b16 %v24
  %v201 = vunpack.c.h.b16 %v24
  %v202 = vunpack.c.l.b16 %v25
  %v203 = vunpack.c.h.b16 %v25
  %v204 = vunpack.c.l.b16 %v26
  %v205 = vunpack.c.l.b16 %v27
  %v206 = vunpack.c.h.b16 %v27
  %v207 = vunpack.c.l.b16 %v28
  %v208 = vunpack.c.h.b16 %v28
  %v209 = vunpack.c.l.b16 %v29
  %v210 = vunpack.c.h.b16 %v29
  %v211 = vunpack.c.l.b16 %v30
  %v212 = vunpack.c.l.b16 %v31
  %v213 = vunpack.c.h.b16 %v31
  %v214 = vunpack.c.l.b16 %v32
  %v215 = vunpack.c.h.b16 %v32
  %v216 = vunpack.c.l.b16 %v33
  %v217 = vunpack.c.h.b16 %v33
  %v218 = vunpack.c.l.b16 %v34
  %v219 = vunpack.c.l.b16 %v35
  %v220 = vunpack.c.h.b16 %v35
  %v221 = vunpack.c.l.b16 %v36
  %v222 = vunpack.c.h.b16 %v36
  %v223 = vunpack.c.l.b16 %v37
  %v224 = vunpack.c.h.b16 %v37
  %v225 = vunpack.c.l.b16 %v38
  %v226 = vunpack.c.l.b16 %v39
  %v227 = vunpack.c.h.b16 %v39
  %v228 = vunpack.c.l.b16 %v40
  %v229 = vunpack.c.h.b16 %v40
  %v230 = vunpack.c.l.b16 %v41
  %v231 = vunpack.c.h.b16 %v41
  %v232 = vunpack.c.l.b16 %v42
  %v233 = vunpack.c.l.b16 %v43
  %v234 = vunpack.c.h.b16 %v43
  %v235 = vunpack.c.l.b16 %v44
  %v236 = vunpack.c.h.b16 %v44
  %v237 = vunpack.c.l.b16 %v45
  %v238 = vunpack.c.h.b16 %v45
  %v239 = vunpack.c.l.b16 %v46
  %v240 = vpack.c.b16 %v191, %v184
  %v241 = vpack.c.b16 %v192, %v185
  %v242 = vpack.c.b16 %v193, %v186
  %v243 = vpack.c.b16 %v194, %v187
  %v244 = vpack.c.b16 %v195, %v188
  %v245 = vpack.c.b16 %v196, %v189
  %v246 = vpack.c.b16 %v197, %v190
  %v247 = vpack.c.b16 %v205, %v198
  %v248 = vpack.c.b16 %v206, %v199
  %v249 = vpack.c.b16 %v207, %v200
  %v250 = vpack.c.b16 %v208, %v201
  %v251 = vpack.c.b16 %v209, %v202
  %v252 = vpack.c.b16 %v210, %v203
  %v253 = vpack.c.b16 %v211, %v204
  %v254 = vpack.c.b16 %v219, %v212
  %v255 = vpack.c.b16 %v220, %v213
  %v256 = vpack.c.b16 %v221, %v214
  %v257 = vpack.c.b16 %v222, %v215
  %v258 = vpack.c.b16 %v223, %v216
  %v259 = vpack.c.b16 %v224, %v217
  %v260 = vpack.c.b16 %v225, %v218
  %v261 = vpack.c.b16 %v233, %v226
  %v262 = vpack.c.b16 %v234, %v227
  %v263 = vpack.c.b16 %v235, %v228
  %v264 = vpack.c.b16 %v236, %v229
  %v265 = vpack.c.b16 %v237, %v230
  %v266 = vpack.c.b16 %v238, %v231
  %v267 = vpack.c.b16 %v239, %v232
  %v390 = vunpack.c.l.b16 %v47
  %v391 = vunpack.c.l.b16 %v48
  %v392 = vunpack.c.l.b16 %v49
  %v393 = vunpack.c.l.b16 %v50
  %v394 = vunpack.c.l.b16 %v51
  %v395 = vunpack.c.l.b16 %v52
  %v396 = vunpack.c.l.b16 %v53
  %v397 = vunpack.c.l.b16 %v54
  %v398 = vunpack.c.l.b16 %v55
  %v399 = vunpack.c.l.b16 %v56
  %v400 = vunpack.c.l.b16 %v57
  %v401 = vunpack.c.l.b16 %v58
  %v402 = vunpack.c.l.b16 %v59
  %v403 = vunpack.c.l.b16 %v60
  %v404 = vunpack.c.l.b16 %v61
  %v405 = vunpack.c.l.b16 %v62
  %v406 = vunpack.c.l.b16 %v63
  %v407 = vunpack.c.l.b16 %v64
  %v408 = vunpack.c.l.b16 %v65
  %v409 = vunpack.c.l.b16 %v66
  %v410 = vunpack.c.l.b16 %v67
  %v411 = vunpack.c.l.b16 %v68
  %v412 = vunpack.c.l.b16 %v69
  %v413 = vunpack.c.l.b16 %v70
  %v414 = vunpack.c.l.b16 %v71
  %v415 = vunpack.c.l.b16 %v72
  %v416 = vunpack.c.l.b16 %v73
  %v417 = vunpack.c.l.b16 %v74
  %v418 = vunpack.c.l.b16 %v75
  %v419 = vunpack.c.l.b16 %v76
  %v420 = vunpack.c.l.b16 %v77
  %v421 = vunpack.c.l.b16 %v78
  %v422 = vunpack.c.l.b16 %v79
  %v423 = vunpack.c.l.b16 %v80
  %v424 = vunpack.c.l.b16 %v81
  %v425 = vunpack.c.l.b16 %v82
  %v426 = vunpack.c.l.b16 %v83
  %v427 = vunpack.c.l.b16 %v84
  %v428 = vunpack.c.l.b16 %v85
  %v429 = vunpack.c.l.b16 %v86
  %v430 = vunpack.c.l.b16 %v87
  %v431 = vunpack.c.l.b16 %v88
  %v432 = vunpack.c.l.b16 %v89
  %v433 = vunpack.c.l.b16 %v90
  %v434 = vunpack.c.l.b16 %v91
  %v435 = vunpack.c.l.b16 %v92
  %v436 = vunpack.c.l.b16 %v93
  %v437 = vunpack.c.l.b16 %v94
  %v438 = vunpack.c.l.b16 %v95
  %v439 = vunpack.c.l.b16 %v96
  %v440 = vunpack.c.l.b16 %v97
  %v441 = vunpack.c.l.b16 %v98
  %v442 = vunpack.c.l.b16 %v99
  %v443 = vunpack.c.l.b16 %v100
  %v444 = vunpack.c.l.b16 %v101
  %v445 = vunpack.c.l.b16 %v102
  %v446 = vunpack.c.l.b16 %v103
  %v447 = vunpack.c.l.b16 %v104
  %v448 = vunpack.c.l.b16 %v105
  %v449 = vunpack.c.l.b16 %v106
  %v450 = vunpack.c.l.b16 %v107
  %v451 = vunpack.c.l.b16 %v108
  %v452 = vunpack.c.l.b16 %v109
  %v453 = vunpack.c.l.b16 %v110
  %v454 = vunpack.c.l.b16 %v111
  %v455 = vunpack.c.l.b16 %v112
  %v456 = vunpack.c.l.b16 %v113
  %v457 = vunpack.c.l.b16 %v114
  %v458 = vunpack.c.l.b16 %v115
  %v459 = vunpack.c.l.b16 %v116
  %v460 = vunpack.c.l.b16 %v117
  %v461 = vunpack.c.l.b16 %v118
  %v462 = vunpack.c.l.b16 %v119
  %v463 = vunpack.c.l.b16 %v120
  %v464 = vunpack.c.l.b16 %v121
  %v465 = vunpack.c.l.b16 %v122
  %v466 = vunpack.c.l.b16 %v123
  %v467 = vunpack.c.l.b16 %v124
  %v468 = vunpack.c.l.b16 %v125
  %v469 = vunpack.c.l.b16 %v126
  %v470 = vunpack.c.l.b16 %v127
  %v471 = vunpack.c.l.b16 %v128
  %v472 = vunpack.c.l.b16 %v129
  %v473 = vunpack.c.l.b16 %v130
  %v474 = vunpack.c.l.b16 %v131
  %v475 = vunpack.c.l.b16 %v132
  %v476 = vunpack.c.l.b16 %v133
  %v477 = vunpack.c.l.b16 %v134
  %v478 = vunpack.c.l.b16 %v135
  %v479 = vunpack.c.l.b16 %v136
  %v480 = vunpack.c.l.b16 %v137
  %v481 = vunpack.c.l.b16 %v138
  %v482 = vunpack.c.l.b16 %v139
  %v483 = vunpack.c.l.b16 %v140
  %v484 = vunpack.c.l.b16 %v141
  %v485 = vunpack.c.l.b16 %v142
  %v486 = vunpack.c.l.b16 %v143
  %v487 = vunpack.c.l.b16 %v144
  %v488 = vpack.c.b16 %v391, %v390
  %v489 = vpack.c.b16 %v393, %v392
  %v490 = vpack.c.b16 %v395, %v394
  %v491 = vpack.c.b16 %v397, %v396
  %v492 = vpack.c.b16 %v399, %v398
  %v493 = vpack.c.b16 %v401, %v400
  %v494 = vpack.c.b16 %v403, %v402
  %v495 = vpack.c.b16 %v405, %v404
  %v496 = vpack.c.b16 %v407, %v406
  %v497 = vpack.c.b16 %v409, %v408
  %v498 = vpack.c.b16 %v411, %v410
  %v499 = vpack.c.b16 %v413, %v412
  %v500 = vpack.c.b16 %v415, %v414
  %v501 = vpack.c.b16 %v417, %v416
  %v502 = vpack.c.b16 %v419, %v418
  %v503 = vpack.c.b16 %v421, %v420
  %v504 = vpack.c.b16 %v423, %v422
  %v505 = vpack.c.b16 %v425, %v424
  %v506 = vpack.c.b16 %v427, %v426
  %v507 = vpack.c.b16 %v429, %v428
  %v508 = vpack.c.b16 %v431, %v430
  %v509 = vpack.c.b16 %v433, %v432
  %v510 = vpack.c.b16 %v435, %v434
  %v511 = vpack.c.b16 %v437, %v436
  %v512 = vpack.c.b16 %v439, %v438
  %v513 = vpack.c.b16 %v441, %v440
  %v514 = vpack.c.b16 %v443, %v442
  %v515 = vpack.c.b16 %v445, %v444
  %v516 = vpack.c.b16 %v447, %v446
  %v517 = vpack.c.b16 %v449, %v448
  %v518 = vpack.c.b16 %v451, %v450
  %v519 = vpack.c.b16 %v453, %v452
  %v520 = vpack.c.b16 %v455, %v454
  %v521 = vpack.c.b16 %v457, %v456
  %v522 = vpack.c.b16 %v459, %v458
  %v523 = vpack.c.b16 %v461, %v460
  %v524 = vpack.c.b16 %v463, %v462
  %v525 = vpack.c.b16 %v465, %v464
  %v526 = vpack.c.b16 %v467, %v466
  %v527 = vpack.c.b16 %v469, %v468
  %v528 = vpack.c.b16 %v471, %v470
  %v529 = vpack.c.b16 %v473, %v472
  %v530 = vpack.c.b16 %v475, %v474
  %v531 = vpack.c.b16 %v477, %v476
  %v532 = vpack.c.b16 %v479, %v478
  %v533 = vpack.c.b16 %v481, %v480
  %v534 = vpack.c.b16 %v483, %v482
  %v535 = vpack.c.b16 %v485, %v484
  %v536 = vpack.c.b16 %v487, %v486
  %vm586 = vcmask 130048
  %v588 = vsel %vm586, %v246, 0
  %v591 = vsel %vm586, %v253, 0
  %v594 = vsel %vm586, %v260, 0
  %v597 = vsel %vm586, %v267, 0
  %599 = vmatprep.subr.bf16.mxu0 0
  %600 = vmatpush1.bf16.msra.mxu0 %v495
  %601 = vmatprep.subr.bf16.mxu0 0
  %602 = vmatpush1.bf16.msra.mxu0 %v494
  %603 = vmatprep.subr.bf16.mxu0 0
  %604 = vmatpush1.bf16.msra.mxu0 %v493
  %605 = vmatprep.subr.bf16.mxu0 0
  %606 = vmatpush1.bf16.msra.mxu0 %v492
  %607 = vmatprep.subr.bf16.mxu0 0
  %608 = vmatpush1.bf16.msra.mxu0 %v491
  %609 = vmatprep.subr.bf16.mxu0 0
  %610 = vmatpush1.bf16.msra.mxu0 %v490
  %611 = vmatprep.subr.bf16.mxu0 0
  %612 = vmatpush1.bf16.msra.mxu0 %v489
  %613 = vmatprep.subr.bf16.mxu0 0
  %614 = vmatpush1.bf16.msra.mxu0 %v488
  %615 = vmatprep.subr.bf16.mxu0 0
  %616 = vmatpush2.bf16.msra.mxu0 %v503
  %617 = vmatprep.subr.bf16.mxu0 0
  %618 = vmatpush2.bf16.msra.mxu0 %v502
  %619 = vmatprep.subr.bf16.mxu0 0
  %620 = vmatpush2.bf16.msra.mxu0 %v501
  %621 = vmatprep.subr.bf16.mxu0 0
  %622 = vmatpush2.bf16.msra.mxu0 %v500
  %623 = vmatprep.subr.bf16.mxu0 0
  %624 = vmatpush2.bf16.msra.mxu0 %v499
  %625 = vmatprep.subr.bf16.mxu0 0
  %626 = vmatpush2.bf16.msra.mxu0 %v498
  %627 = vmatprep.subr.bf16.mxu0 0
  %628 = vmatpush2.bf16.msra.mxu0 %v497
  %629 = vmatprep.subr.bf16.mxu0 0
  %630 = vmatpush2.bf16.msra.mxu0 %v496
  %631 = vmatprep.mubr.bf16.mxu0 %v241
  %632 = vmatmul.mubr.bf16.gmra.mxu0 %v240
  %v633 = vpop.f32.mrf.mxu0
  %v634 = vadd.f32 %v150, %v633
  %v635 = vpop.f32.mrf.mxu0
  %v636 = vpop.f32.mrf.mxu0
  %v637 = vadd.f32 %v150, %v636
  %v638 = vpop.f32.mrf.mxu0
  %639 = vmatprep.mubr.bf16.mxu0 %v248
  %640 = vmatmul.mubr.bf16.gmra.mxu0 %v247
  %v641 = vpop.f32.mrf.mxu0
  %v642 = vadd.f32 %v150, %v641
  %v643 = vpop.f32.mrf.mxu0
  %v644 = vpop.f32.mrf.mxu0
  %v645 = vadd.f32 %v150, %v644
  %v646 = vpop.f32.mrf.mxu0
  %647 = vmatprep.mubr.bf16.mxu0 %v255
  %648 = vmatmul.mubr.bf16.gmra.mxu0 %v254
  %v649 = vpop.f32.mrf.mxu0
  %v650 = vadd.f32 %v150, %v649
  %v651 = vpop.f32.mrf.mxu0
  %v652 = vpop.f32.mrf.mxu0
  %v653 = vadd.f32 %v150, %v652
  %v654 = vpop.f32.mrf.mxu0
  %655 = vmatprep.mubr.bf16.mxu0 %v262
  %656 = vmatmul.mubr.bf16.gmra.mxu0 %v261
  %v657 = vpop.f32.mrf.mxu0
  %v658 = vadd.f32 %v150, %v657
  %v659 = vpop.f32.mrf.mxu0
  %v660 = vpop.f32.mrf.mxu0
  %v661 = vadd.f32 %v150, %v660
  %v662 = vpop.f32.mrf.mxu0
  %663 = vdwg.mxu0
  %664 = vmatprep.subr.bf16.mxu0 0
  %665 = vmatpush1.bf16.msra.mxu0 %v511
  %666 = vmatprep.subr.bf16.mxu0 0
  %667 = vmatpush1.bf16.msra.mxu0 %v510
  %668 = vmatprep.subr.bf16.mxu0 0
  %669 = vmatpush1.bf16.msra.mxu0 %v509
  %670 = vmatprep.subr.bf16.mxu0 0
  %671 = vmatpush1.bf16.msra.mxu0 %v508
  %672 = vmatprep.subr.bf16.mxu0 0
  %673 = vmatpush1.bf16.msra.mxu0 %v507
  %674 = vmatprep.subr.bf16.mxu0 0
  %675 = vmatpush1.bf16.msra.mxu0 %v506
  %676 = vmatprep.subr.bf16.mxu0 0
  %677 = vmatpush1.bf16.msra.mxu0 %v505
  %678 = vmatprep.subr.bf16.mxu0 0
  %679 = vmatpush1.bf16.msra.mxu0 %v504
  %680 = vmatprep.subr.bf16.mxu0 0
  %681 = vmatpush2.bf16.msra.mxu0 %v519
  %682 = vmatprep.subr.bf16.mxu0 0
  %683 = vmatpush2.bf16.msra.mxu0 %v518
  %684 = vmatprep.subr.bf16.mxu0 0
  %685 = vmatpush2.bf16.msra.mxu0 %v517
  %686 = vmatprep.subr.bf16.mxu0 0
  %687 = vmatpush2.bf16.msra.mxu0 %v516
  %688 = vmatprep.subr.bf16.mxu0 0
  %689 = vmatpush2.bf16.msra.mxu0 %v515
  %690 = vmatprep.subr.bf16.mxu0 0
  %691 = vmatpush2.bf16.msra.mxu0 %v514
  %692 = vmatprep.subr.bf16.mxu0 0
  %693 = vmatpush2.bf16.msra.mxu0 %v513
  %694 = vmatprep.subr.bf16.mxu0 0
  %695 = vmatpush2.bf16.msra.mxu0 %v512
  %696 = vmatprep.mubr.bf16.mxu0 %v243
  %697 = vmatmul.mubr.bf16.gmra.mxu0 %v242
  %v698 = vpop.f32.mrf.mxu0
  %v699 = vadd.f32 %v634, %v698
  %v700 = vpop.f32.mrf.mxu0
  %v701 = vpop.f32.mrf.mxu0
  %v702 = vadd.f32 %v637, %v701
  %v703 = vpop.f32.mrf.mxu0
  %704 = vmatprep.mubr.bf16.mxu0 %v250
  %705 = vmatmul.mubr.bf16.gmra.mxu0 %v249
  %v706 = vpop.f32.mrf.mxu0
  %v707 = vadd.f32 %v642, %v706
  %v708 = vpop.f32.mrf.mxu0
  %v709 = vpop.f32.mrf.mxu0
  %v710 = vadd.f32 %v645, %v709
  %v711 = vpop.f32.mrf.mxu0
  %712 = vmatprep.mubr.bf16.mxu0 %v257
  %713 = vmatmul.mubr.bf16.gmra.mxu0 %v256
  %v714 = vpop.f32.mrf.mxu0
  %v715 = vadd.f32 %v650, %v714
  %v716 = vpop.f32.mrf.mxu0
  %v717 = vpop.f32.mrf.mxu0
  %v718 = vadd.f32 %v653, %v717
  %v719 = vpop.f32.mrf.mxu0
  %720 = vmatprep.mubr.bf16.mxu0 %v264
  %721 = vmatmul.mubr.bf16.gmra.mxu0 %v263
  %v722 = vpop.f32.mrf.mxu0
  %v723 = vadd.f32 %v658, %v722
  %v724 = vpop.f32.mrf.mxu0
  %v725 = vpop.f32.mrf.mxu0
  %v726 = vadd.f32 %v661, %v725
  %v727 = vpop.f32.mrf.mxu0
  %728 = vdwg.mxu0
  %729 = vmatprep.subr.bf16.mxu0 0
  %730 = vmatpush1.bf16.msra.mxu0 %v527
  %731 = vmatprep.subr.bf16.mxu0 0
  %732 = vmatpush1.bf16.msra.mxu0 %v526
  %733 = vmatprep.subr.bf16.mxu0 0
  %734 = vmatpush1.bf16.msra.mxu0 %v525
  %735 = vmatprep.subr.bf16.mxu0 0
  %736 = vmatpush1.bf16.msra.mxu0 %v524
  %737 = vmatprep.subr.bf16.mxu0 0
  %738 = vmatpush1.bf16.msra.mxu0 %v523
  %739 = vmatprep.subr.bf16.mxu0 0
  %740 = vmatpush1.bf16.msra.mxu0 %v522
  %741 = vmatprep.subr.bf16.mxu0 0
  %742 = vmatpush1.bf16.msra.mxu0 %v521
  %743 = vmatprep.subr.bf16.mxu0 0
  %744 = vmatpush1.bf16.msra.mxu0 %v520
  %745 = vmatprep.subr.bf16.mxu0 0
  %746 = vmatpush2.bf16.msra.mxu0 %v535
  %747 = vmatprep.subr.bf16.mxu0 0
  %748 = vmatpush2.bf16.msra.mxu0 %v534
  %749 = vmatprep.subr.bf16.mxu0 0
  %750 = vmatpush2.bf16.msra.mxu0 %v533
  %751 = vmatprep.subr.bf16.mxu0 0
  %752 = vmatpush2.bf16.msra.mxu0 %v532
  %753 = vmatprep.subr.bf16.mxu0 0
  %754 = vmatpush2.bf16.msra.mxu0 %v531
  %755 = vmatprep.subr.bf16.mxu0 0
  %756 = vmatpush2.bf16.msra.mxu0 %v530
  %757 = vmatprep.subr.bf16.mxu0 0
  %758 = vmatpush2.bf16.msra.mxu0 %v529
  %759 = vmatprep.subr.bf16.mxu0 0
  %760 = vmatpush2.bf16.msra.mxu0 %v528
  %761 = vmatprep.mubr.bf16.mxu0 %v245
  %762 = vmatmul.mubr.bf16.gmra.mxu0 %v244
  %v763 = vpop.f32.mrf.mxu0
  %v764 = vadd.f32 %v699, %v763
  %v765 = vpop.f32.mrf.mxu0
  %v766 = vpop.f32.mrf.mxu0
  %v767 = vadd.f32 %v702, %v766
  %v768 = vpop.f32.mrf.mxu0
  %769 = vmatprep.mubr.bf16.mxu0 %v252
  %770 = vmatmul.mubr.bf16.gmra.mxu0 %v251
  %v771 = vpop.f32.mrf.mxu0
  %v772 = vadd.f32 %v707, %v771
  %v773 = vpop.f32.mrf.mxu0
  %v774 = vpop.f32.mrf.mxu0
  %v775 = vadd.f32 %v710, %v774
  %v776 = vpop.f32.mrf.mxu0
  %777 = vmatprep.mubr.bf16.mxu0 %v259
  %778 = vmatmul.mubr.bf16.gmra.mxu0 %v258
  %v779 = vpop.f32.mrf.mxu0
  %v780 = vadd.f32 %v715, %v779
  %v781 = vpop.f32.mrf.mxu0
  %v782 = vpop.f32.mrf.mxu0
  %v783 = vadd.f32 %v718, %v782
  %v784 = vpop.f32.mrf.mxu0
  %785 = vmatprep.mubr.bf16.mxu0 %v266
  %786 = vmatmul.mubr.bf16.gmra.mxu0 %v265
  %v787 = vpop.f32.mrf.mxu0
  %v788 = vadd.f32 %v723, %v787
  %v789 = vpop.f32.mrf.mxu0
  %v790 = vpop.f32.mrf.mxu0
  %v791 = vadd.f32 %v726, %v790
  %v792 = vpop.f32.mrf.mxu0
  %793 = vdwg.mxu0
  %794 = vmatprep.subr.bf16.mxu0 0
  %795 = vmatpush1.bf16.msra.mxu0 0
  %796 = vmatprep.subr.bf16.mxu0 0
  %797 = vmatpush1.bf16.msra.mxu0 0
  %798 = vmatprep.subr.bf16.mxu0 0
  %799 = vmatpush1.bf16.msra.mxu0 0
  %800 = vmatprep.subr.bf16.mxu0 0
  %801 = vmatpush1.bf16.msra.mxu0 0
  %802 = vmatprep.subr.bf16.mxu0 0
  %803 = vmatpush1.bf16.msra.mxu0 0
  %804 = vmatprep.subr.bf16.mxu0 0
  %805 = vmatpush1.bf16.msra.mxu0 0
  %806 = vmatprep.subr.bf16.mxu0 0
  %807 = vmatpush1.bf16.msra.mxu0 0
  %808 = vmatprep.subr.bf16.mxu0 0
  %809 = vmatpush1.bf16.msra.mxu0 %v536
  %810 = vmatprep.subr.bf16.mxu0 0
  %811 = vmatpush2.bf16.msra.mxu0 0
  %812 = vmatprep.subr.bf16.mxu0 0
  %813 = vmatpush2.bf16.msra.mxu0 0
  %814 = vmatprep.subr.bf16.mxu0 0
  %815 = vmatpush2.bf16.msra.mxu0 0
  %816 = vmatprep.subr.bf16.mxu0 0
  %817 = vmatpush2.bf16.msra.mxu0 0
  %818 = vmatprep.subr.bf16.mxu0 0
  %819 = vmatpush2.bf16.msra.mxu0 0
  %820 = vmatprep.subr.bf16.mxu0 0
  %821 = vmatpush2.bf16.msra.mxu0 0
  %822 = vmatprep.subr.bf16.mxu0 0
  %823 = vmatpush2.bf16.msra.mxu0 0
  %824 = vmatprep.subr.bf16.mxu0 0
  %825 = vmatpush2.bf16.msra.mxu0 0
  %826 = vmatprep.mubr.bf16.mxu0 0
  %827 = vmatmul.mubr.bf16.gmra.mxu0 %v588
  %v828 = vpop.f32.mrf.mxu0
  %v829 = vadd.f32 %v764, %v828
  %v830 = vpop.f32.mrf.mxu0
  %v831 = vpop.f32.mrf.mxu0
  %v832 = vadd.f32 %v767, %v831
  %v833 = vpop.f32.mrf.mxu0
  %834 = vmatprep.mubr.bf16.mxu0 0
  %835 = vmatmul.mubr.bf16.gmra.mxu0 %v591
  %v836 = vpop.f32.mrf.mxu0
  %v837 = vadd.f32 %v772, %v836
  %v838 = vpop.f32.mrf.mxu0
  %v839 = vpop.f32.mrf.mxu0
  %v840 = vadd.f32 %v775, %v839
  %v841 = vpop.f32.mrf.mxu0
  %842 = vmatprep.mubr.bf16.mxu0 0
  %843 = vmatmul.mubr.bf16.gmra.mxu0 %v594
  %v844 = vpop.f32.mrf.mxu0
  %v845 = vadd.f32 %v780, %v844
  %v846 = vpop.f32.mrf.mxu0
  %v847 = vpop.f32.mrf.mxu0
  %v848 = vadd.f32 %v783, %v847
  %v849 = vpop.f32.mrf.mxu0
  %850 = vmatprep.mubr.bf16.mxu0 0
  %851 = vmatmul.mubr.bf16.gmra.mxu0 %v597
  %v852 = vpop.f32.mrf.mxu0
  %v853 = vadd.f32 %v788, %v852
  %v854 = vpop.f32.mrf.mxu0
  %v855 = vpop.f32.mrf.mxu0
  %v856 = vadd.f32 %v791, %v855
  %v857 = vpop.f32.mrf.mxu0
  %858 = vdwg.mxu0
  %859 = vst [vmem:[%s3] sm:$0xff] %v829
  %860 = vst [vmem:[%s3 + $0x8] sm:$0xff] %v832
  %861 = vst [vmem:[%s3 + $0x10] sm:$0xff] %v837
  %862 = vst [vmem:[%s3 + $0x18] sm:$0xff] %v840
  %863 = vst [vmem:[%s3 + $0x20] sm:$0xff] %v845
  %864 = vst [vmem:[%s3 + $0x28] sm:$0xff] %v848
  %865 = vst [vmem:[%s3 + $0x30] sm:$0xff] %v853
  %866 = vst [vmem:[%s3 + $0x38] sm:$0xff] %v856
  // Predicated region
  $region14: #{mnist_logistic_forward.1} parent=0 // pred_check
    _
  $region15: #{mnist_logistic_forward.1} parent=0 // pred_check_branch
    %868 = sbr.rel (0) target = $region17
  $region16: #{mnist_logistic_forward.1} parent=0 // pred_region
    _
  $region17: #{mnist_logistic_forward.1} parent=0 // pred_fallthru
    _
  // Predicated region
  $region18: #{mnist_logistic_forward.1} parent=0 // pred_check
    _
  $region19: #{mnist_logistic_forward.1} parent=0 // pred_check_branch
    %870 = sbr.rel (0) target = $region21
  $region20: #{mnist_logistic_forward.1} parent=0 // pred_region
    _
  $region21: #{mnist_logistic_forward.1} parent=0 // pred_fallthru
    _

</llo_original>
